<compile_context>
chip_gen: v5e
topology: v5e:2x2
jax: 0.10.0
libtpu: 0.0.40
codegen_flags: <defaults>
</compile_context>

<pallas_src>
import functools

import jax
import jax.numpy as jnp
from jax.experimental import pallas as pl
from jax.experimental.pallas import tpu as pltpu


def _round_up(x, m):
    return (x + m - 1) // m * m


def _conv_kernel(x_ref, w_ref, b_ref, o_ref, p_ref, *, KH, KW, Cin_pad, W,
                 L_lane, NB):
    # x_ref: (NB, Cin_pad, Lpad)   flattened, right-padded images (NB batch elems)
    # w_ref: (Cout, K)             K = KH*KW*Cin_pad, tap-major (kh, kw, ci) order
    # b_ref: (Cout, 1)             float32 bias column
    # o_ref: (NB, Cout, L_lane)    full padded plane (cropped to (Ho, Wo) in wrapper)
    # p_ref: (K, NB*L_lane)        im2col scratch, spatial+batch on lanes (lane-dense)

    # im2col: one lane-shifted (Cin_pad, L_lane) slab per kernel tap and batch elem.
    # Row starts are multiples of Cin_pad (>= 8) -> unmasked sublane-aligned stores.
    for b in range(NB):
        col = b * L_lane
        for kh in range(KH):
            for kw in range(KW):
                row = (kh * KW + kw) * Cin_pad
                shift = kh * W + kw
                p_ref[pl.ds(row, Cin_pad), pl.ds(col, L_lane)] = (
                    x_ref[b, :, pl.ds(shift, L_lane)].astype(p_ref.dtype))

    # One MXU matmul over the folded contraction axis for all NB planes, then bias.
    out = jnp.dot(w_ref[...], p_ref[...], preferred_element_type=jnp.float32)
    out = out + b_ref[...]

    # Lane-aligned static slices back into per-batch output planes.
    for b in range(NB):
        o_ref[b] = out[:, b * L_lane:(b + 1) * L_lane].astype(o_ref.dtype)


def conv2d_pallas(x_nchw, w_oihw, bias, ker, *,
                  vmem_budget_bytes=40 * 1024 * 1024):
    """Equivalent of nn.Conv2d(inp, outp, ker)(x) for NCHW input, OIHW weight."""
    N, Cin, H, W = x_nchw.shape
    Cout = w_oihw.shape[0]
    KH = KW = ker
    Ho, Wo = H - KH + 1, W - KW + 1

    Cin_pad = _round_up(Cin, 8)               # sublane-aligned im2col rows
    K = KH * KW * Cin_pad
    L = H * W
    L_lane = _round_up(L, 128)                # lane-dense output stores
    max_shift = (KH - 1) * W + (KW - 1)
    Lpad = _round_up(L_lane + max_shift, 128)  # room for every tap's lane shift

    dtype = x_nchw.dtype
    itemsize = jnp.dtype(dtype).itemsize

    # Per-step VMEM footprint for a candidate NB (scratch single-buffered,
    # input/output/weight blocks double-buffered by the auto-pipeline).
    def footprint(nb):
        p_b = K * nb * L_lane * itemsize
        x_b = 2 * nb * Cin_pad * Lpad * itemsize
        o_b = 2 * nb * Cout * L_lane * itemsize
        w_b = 2 * Cout * K * itemsize + 2 * Cout * 4
        return p_b + x_b + o_b + w_b

    # NB = largest divisor of N whose footprint fits the budget (>= 1 always).
    NB = 1
    for cand in range(1, N + 1):
        if N % cand == 0 and footprint(cand) <= vmem_budget_bytes:
            NB = cand

    # Glue (contiguous zero-pads only — no NCHW<->NHWC transposes):
    x_flat = jnp.pad(x_nchw.reshape(N, Cin, L),
                     ((0, 0), (0, Cin_pad - Cin), (0, Lpad - L)))
    # Weight folded to (Cout, K) with the same (kh, kw, ci) ordering as the
    # im2col rows; padded channels get zero weight rows.
    w_f = jnp.transpose(w_oihw, (0, 2, 3, 1))                       # (Cout,KH,KW,Cin)
    w_f = jnp.pad(w_f, ((0, 0), (0, 0), (0, 0), (0, Cin_pad - Cin)))
    w2 = w_f.reshape(Cout, K).astype(dtype)
    b2 = bias.reshape(Cout, 1).astype(jnp.float32)

    kernel = functools.partial(_conv_kernel, KH=KH, KW=KW, Cin_pad=Cin_pad,
                               W=W, L_lane=L_lane, NB=NB)

    vmem_limit = int(min(max(footprint(NB) * 2, 32 * 1024 * 1024),
                         100 * 1024 * 1024))

    out_flat = pl.pallas_call(
        kernel,
        out_shape=jax.ShapeDtypeStruct((N, Cout, L_lane), dtype),
        grid_spec=pltpu.PrefetchScalarGridSpec(
            num_scalar_prefetch=0,
            grid=(N // NB,),
            in_specs=[
                pl.BlockSpec((NB, Cin_pad, Lpad), lambda g: (g, 0, 0)),
                pl.BlockSpec((Cout, K), lambda g: (0, 0)),
                pl.BlockSpec((Cout, 1), lambda g: (0, 0)),
            ],
            out_specs=pl.BlockSpec((NB, Cout, L_lane), lambda g: (g, 0, 0)),
            scratch_shapes=[pltpu.VMEM((K, NB * L_lane), dtype)],
        ),
        compiler_params=pltpu.CompilerParams(
            dimension_semantics=("parallel",),
            vmem_limit_bytes=vmem_limit),
    )(x_flat, w2, b2)

    # Crop the padded full plane back to the valid conv output window, NCHW.
    return out_flat[:, :, :L].reshape(N, Cout, H, W)[:, :, :Ho, :Wo]


if __name__ == "__main__":
    # Module config (small, consistent with nn.Conv2d(inp, outp, ker)).
    inp, outp, ker = 4, 8, 3
    N, H, W = 2, 16, 16

    key = jax.random.PRNGKey(0)
    kx, kw, kb = jax.random.split(key, 3)

    # Deterministic synthetic parameters (PyTorch-style uniform fan-in scaling).
    fan_in = inp * ker * ker
    bound = 1.0 / (fan_in ** 0.5)
    x = jax.random.normal(kx, (N, inp, H, W), dtype=jnp.float32)          # NCHW
    w = jax.random.uniform(kw, (outp, inp, ker, ker), jnp.float32,
                           minval=-bound, maxval=bound)                   # OIHW
    b = jax.random.uniform(kb, (outp,), jnp.float32,
                           minval=-bound, maxval=bound)

    out = conv2d_pallas(x, w, b, ker)
    out = jax.block_until_ready(out)

    # Sanity check against the XLA reference conv (same semantics as nn.Conv2d).
    ref = jax.lax.conv_general_dilated(
        x, w, window_strides=(1, 1), padding="VALID",
        dimension_numbers=("NCHW", "OIHW", "NCHW")) + b.reshape(1, outp, 1, 1)
    assert out.shape == (N, outp, H - ker + 1, W - ker + 1)
    assert jnp.allclose(out, ref, atol=1e-4, rtol=1e-4)

    print("KERNEL_OK")
</pallas_src>

<mosaic_0001>
module attributes {stable_mosaic.version = 11 : i64} {
  func.func @_conv_kernel(%arg0: i32, %arg1: memref<2x8x384xf32, #tpu.memory_space<vmem>>, %arg2: memref<8x72xf32, #tpu.memory_space<vmem>>, %arg3: memref<8x1xf32, #tpu.memory_space<vmem>>, %arg4: memref<2x8x256xf32, #tpu.memory_space<vmem>>, %arg5: memref<72x512xf32, #tpu.memory_space<vmem>>) attributes {dimension_semantics = [#tpu.dimension_semantics<parallel>], iteration_bounds = array<i64: 1>, scalar_prefetch = 0 : i64, scratch_operands = 1 : i64, tpu.core_type = #tpu.core_type<tc>, window_params = [{transform_indices = @transform_0, window_bounds = array<i64: 2, 8, 384>}, {pipeline_mode = #tpu.pipeline_mode<synchronous>, transform_indices = @transform_1, window_bounds = array<i64: 8, 72>}, {pipeline_mode = #tpu.pipeline_mode<synchronous>, transform_indices = @transform_2, window_bounds = array<i64: 8, 1>}, {transform_indices = @transform_3, window_bounds = array<i64: 2, 8, 256>}]} {
    %c0 = arith.constant 0 : index
    %c0_0 = arith.constant 0 : index
    %c0_1 = arith.constant 0 : index
    %0 = vector.load %arg1[%c0, %c0_0, %c0_1] : memref<2x8x384xf32, #tpu.memory_space<vmem>>, vector<1x8x256xf32>
    %1 = vector.shape_cast %0 : vector<1x8x256xf32> to vector<8x256xf32>
    %c0_2 = arith.constant 0 : index
    %c0_3 = arith.constant 0 : index
    %2 = vector.load %arg5[%c0_2, %c0_3] : memref<72x512xf32, #tpu.memory_space<vmem>>, vector<8x256xf32>
    tpu.vector_store %arg5[%c0_2, %c0_3], %1 {strides = array<i32>} : memref<72x512xf32, #tpu.memory_space<vmem>>, vector<8x256xf32>,
    %c0_4 = arith.constant 0 : index
    %c0_5 = arith.constant 0 : index
    %c1 = arith.constant 1 : index
    %3 = vector.load %arg1[%c0_4, %c0_5, %c1] : memref<2x8x384xf32, #tpu.memory_space<vmem>>, vector<1x8x256xf32>
    %4 = vector.shape_cast %3 : vector<1x8x256xf32> to vector<8x256xf32>
    %c8 = arith.constant 8 : index
    %c0_6 = arith.constant 0 : index
    %5 = vector.load %arg5[%c8, %c0_6] : memref<72x512xf32, #tpu.memory_space<vmem>>, vector<8x256xf32>
    tpu.vector_store %arg5[%c8, %c0_6], %4 {strides = array<i32>} : memref<72x512xf32, #tpu.memory_space<vmem>>, vector<8x256xf32>,
    %c0_7 = arith.constant 0 : index
    %c0_8 = arith.constant 0 : index
    %c2 = arith.constant 2 : index
    %6 = vector.load %arg1[%c0_7, %c0_8, %c2] : memref<2x8x384xf32, #tpu.memory_space<vmem>>, vector<1x8x256xf32>
    %7 = vector.shape_cast %6 : vector<1x8x256xf32> to vector<8x256xf32>
    %c16 = arith.constant 16 : index
    %c0_9 = arith.constant 0 : index
    %8 = vector.load %arg5[%c16, %c0_9] : memref<72x512xf32, #tpu.memory_space<vmem>>, vector<8x256xf32>
    tpu.vector_store %arg5[%c16, %c0_9], %7 {strides = array<i32>} : memref<72x512xf32, #tpu.memory_space<vmem>>, vector<8x256xf32>,
    %c0_10 = arith.constant 0 : index
    %c0_11 = arith.constant 0 : index
    %c16_12 = arith.constant 16 : index
    %9 = vector.load %arg1[%c0_10, %c0_11, %c16_12] : memref<2x8x384xf32, #tpu.memory_space<vmem>>, vector<1x8x256xf32>
    %10 = vector.shape_cast %9 : vector<1x8x256xf32> to vector<8x256xf32>
    %c24 = arith.constant 24 : index
    %c0_13 = arith.constant 0 : index
    %11 = vector.load %arg5[%c24, %c0_13] : memref<72x512xf32, #tpu.memory_space<vmem>>, vector<8x256xf32>
    tpu.vector_store %arg5[%c24, %c0_13], %10 {strides = array<i32>} : memref<72x512xf32, #tpu.memory_space<vmem>>, vector<8x256xf32>,
    %c0_14 = arith.constant 0 : index
    %c0_15 = arith.constant 0 : index
    %c17 = arith.constant 17 : index
    %12 = vector.load %arg1[%c0_14, %c0_15, %c17] : memref<2x8x384xf32, #tpu.memory_space<vmem>>, vector<1x8x256xf32>
    %13 = vector.shape_cast %12 : vector<1x8x256xf32> to vector<8x256xf32>
    %c32 = arith.constant 32 : index
    %c0_16 = arith.constant 0 : index
    %14 = vector.load %arg5[%c32, %c0_16] : memref<72x512xf32, #tpu.memory_space<vmem>>, vector<8x256xf32>
    tpu.vector_store %arg5[%c32, %c0_16], %13 {strides = array<i32>} : memref<72x512xf32, #tpu.memory_space<vmem>>, vector<8x256xf32>,
    %c0_17 = arith.constant 0 : index
    %c0_18 = arith.constant 0 : index
    %c18 = arith.constant 18 : index
    %15 = vector.load %arg1[%c0_17, %c0_18, %c18] : memref<2x8x384xf32, #tpu.memory_space<vmem>>, vector<1x8x256xf32>
    %16 = vector.shape_cast %15 : vector<1x8x256xf32> to vector<8x256xf32>
    %c40 = arith.constant 40 : index
    %c0_19 = arith.constant 0 : index
    %17 = vector.load %arg5[%c40, %c0_19] : memref<72x512xf32, #tpu.memory_space<vmem>>, vector<8x256xf32>
    tpu.vector_store %arg5[%c40, %c0_19], %16 {strides = array<i32>} : memref<72x512xf32, #tpu.memory_space<vmem>>, vector<8x256xf32>,
    %c0_20 = arith.constant 0 : index
    %c0_21 = arith.constant 0 : index
    %c32_22 = arith.constant 32 : index
    %18 = vector.load %arg1[%c0_20, %c0_21, %c32_22] : memref<2x8x384xf32, #tpu.memory_space<vmem>>, vector<1x8x256xf32>
    %19 = vector.shape_cast %18 : vector<1x8x256xf32> to vector<8x256xf32>
    %c48 = arith.constant 48 : index
    %c0_23 = arith.constant 0 : index
    %20 = vector.load %arg5[%c48, %c0_23] : memref<72x512xf32, #tpu.memory_space<vmem>>, vector<8x256xf32>
    tpu.vector_store %arg5[%c48, %c0_23], %19 {strides = array<i32>} : memref<72x512xf32, #tpu.memory_space<vmem>>, vector<8x256xf32>,
    %c0_24 = arith.constant 0 : index
    %c0_25 = arith.constant 0 : index
    %c33 = arith.constant 33 : index
    %21 = vector.load %arg1[%c0_24, %c0_25, %c33] : memref<2x8x384xf32, #tpu.memory_space<vmem>>, vector<1x8x256xf32>
    %22 = vector.shape_cast %21 : vector<1x8x256xf32> to vector<8x256xf32>
    %c56 = arith.constant 56 : index
    %c0_26 = arith.constant 0 : index
    %23 = vector.load %arg5[%c56, %c0_26] : memref<72x512xf32, #tpu.memory_space<vmem>>, vector<8x256xf32>
    tpu.vector_store %arg5[%c56, %c0_26], %22 {strides = array<i32>} : memref<72x512xf32, #tpu.memory_space<vmem>>, vector<8x256xf32>,
    %c0_27 = arith.constant 0 : index
    %c0_28 = arith.constant 0 : index
    %c34 = arith.constant 34 : index
    %24 = vector.load %arg1[%c0_27, %c0_28, %c34] : memref<2x8x384xf32, #tpu.memory_space<vmem>>, vector<1x8x256xf32>
    %25 = vector.shape_cast %24 : vector<1x8x256xf32> to vector<8x256xf32>
    %c64 = arith.constant 64 : index
    %c0_29 = arith.constant 0 : index
    %26 = vector.load %arg5[%c64, %c0_29] : memref<72x512xf32, #tpu.memory_space<vmem>>, vector<8x256xf32>
    tpu.vector_store %arg5[%c64, %c0_29], %25 {strides = array<i32>} : memref<72x512xf32, #tpu.memory_space<vmem>>, vector<8x256xf32>,
    %c1_30 = arith.constant 1 : index
    %c0_31 = arith.constant 0 : index
    %c0_32 = arith.constant 0 : index
    %27 = vector.load %arg1[%c1_30, %c0_31, %c0_32] : memref<2x8x384xf32, #tpu.memory_space<vmem>>, vector<1x8x256xf32>
    %28 = vector.shape_cast %27 : vector<1x8x256xf32> to vector<8x256xf32>
    %c0_33 = arith.constant 0 : index
    %c256 = arith.constant 256 : index
    %29 = vector.load %arg5[%c0_33, %c256] : memref<72x512xf32, #tpu.memory_space<vmem>>, vector<8x256xf32>
    tpu.vector_store %arg5[%c0_33, %c256], %28 {strides = array<i32>} : memref<72x512xf32, #tpu.memory_space<vmem>>, vector<8x256xf32>,
    %c1_34 = arith.constant 1 : index
    %c0_35 = arith.constant 0 : index
    %c1_36 = arith.constant 1 : index
    %30 = vector.load %arg1[%c1_34, %c0_35, %c1_36] : memref<2x8x384xf32, #tpu.memory_space<vmem>>, vector<1x8x256xf32>
    %31 = vector.shape_cast %30 : vector<1x8x256xf32> to vector<8x256xf32>
    %c8_37 = arith.constant 8 : index
    %c256_38 = arith.constant 256 : index
    %32 = vector.load %arg5[%c8_37, %c256_38] : memref<72x512xf32, #tpu.memory_space<vmem>>, vector<8x256xf32>
    tpu.vector_store %arg5[%c8_37, %c256_38], %31 {strides = array<i32>} : memref<72x512xf32, #tpu.memory_space<vmem>>, vector<8x256xf32>,
    %c1_39 = arith.constant 1 : index
    %c0_40 = arith.constant 0 : index
    %c2_41 = arith.constant 2 : index
    %33 = vector.load %arg1[%c1_39, %c0_40, %c2_41] : memref<2x8x384xf32, #tpu.memory_space<vmem>>, vector<1x8x256xf32>
    %34 = vector.shape_cast %33 : vector<1x8x256xf32> to vector<8x256xf32>
    %c16_42 = arith.constant 16 : index
    %c256_43 = arith.constant 256 : index
    %35 = vector.load %arg5[%c16_42, %c256_43] : memref<72x512xf32, #tpu.memory_space<vmem>>, vector<8x256xf32>
    tpu.vector_store %arg5[%c16_42, %c256_43], %34 {strides = array<i32>} : memref<72x512xf32, #tpu.memory_space<vmem>>, vector<8x256xf32>,
    %c1_44 = arith.constant 1 : index
    %c0_45 = arith.constant 0 : index
    %c16_46 = arith.constant 16 : index
    %36 = vector.load %arg1[%c1_44, %c0_45, %c16_46] : memref<2x8x384xf32, #tpu.memory_space<vmem>>, vector<1x8x256xf32>
    %37 = vector.shape_cast %36 : vector<1x8x256xf32> to vector<8x256xf32>
    %c24_47 = arith.constant 24 : index
    %c256_48 = arith.constant 256 : index
    %38 = vector.load %arg5[%c24_47, %c256_48] : memref<72x512xf32, #tpu.memory_space<vmem>>, vector<8x256xf32>
    tpu.vector_store %arg5[%c24_47, %c256_48], %37 {strides = array<i32>} : memref<72x512xf32, #tpu.memory_space<vmem>>, vector<8x256xf32>,
    %c1_49 = arith.constant 1 : index
    %c0_50 = arith.constant 0 : index
    %c17_51 = arith.constant 17 : index
    %39 = vector.load %arg1[%c1_49, %c0_50, %c17_51] : memref<2x8x384xf32, #tpu.memory_space<vmem>>, vector<1x8x256xf32>
    %40 = vector.shape_cast %39 : vector<1x8x256xf32> to vector<8x256xf32>
    %c32_52 = arith.constant 32 : index
    %c256_53 = arith.constant 256 : index
    %41 = vector.load %arg5[%c32_52, %c256_53] : memref<72x512xf32, #tpu.memory_space<vmem>>, vector<8x256xf32>
    tpu.vector_store %arg5[%c32_52, %c256_53], %40 {strides = array<i32>} : memref<72x512xf32, #tpu.memory_space<vmem>>, vector<8x256xf32>,
    %c1_54 = arith.constant 1 : index
    %c0_55 = arith.constant 0 : index
    %c18_56 = arith.constant 18 : index
    %42 = vector.load %arg1[%c1_54, %c0_55, %c18_56] : memref<2x8x384xf32, #tpu.memory_space<vmem>>, vector<1x8x256xf32>
    %43 = vector.shape_cast %42 : vector<1x8x256xf32> to vector<8x256xf32>
    %c40_57 = arith.constant 40 : index
    %c256_58 = arith.constant 256 : index
    %44 = vector.load %arg5[%c40_57, %c256_58] : memref<72x512xf32, #tpu.memory_space<vmem>>, vector<8x256xf32>
    tpu.vector_store %arg5[%c40_57, %c256_58], %43 {strides = array<i32>} : memref<72x512xf32, #tpu.memory_space<vmem>>, vector<8x256xf32>,
    %c1_59 = arith.constant 1 : index
    %c0_60 = arith.constant 0 : index
    %c32_61 = arith.constant 32 : index
    %45 = vector.load %arg1[%c1_59, %c0_60, %c32_61] : memref<2x8x384xf32, #tpu.memory_space<vmem>>, vector<1x8x256xf32>
    %46 = vector.shape_cast %45 : vector<1x8x256xf32> to vector<8x256xf32>
    %c48_62 = arith.constant 48 : index
    %c256_63 = arith.constant 256 : index
    %47 = vector.load %arg5[%c48_62, %c256_63] : memref<72x512xf32, #tpu.memory_space<vmem>>, vector<8x256xf32>
    tpu.vector_store %arg5[%c48_62, %c256_63], %46 {strides = array<i32>} : memref<72x512xf32, #tpu.memory_space<vmem>>, vector<8x256xf32>,
    %c1_64 = arith.constant 1 : index
    %c0_65 = arith.constant 0 : index
    %c33_66 = arith.constant 33 : index
    %48 = vector.load %arg1[%c1_64, %c0_65, %c33_66] : memref<2x8x384xf32, #tpu.memory_space<vmem>>, vector<1x8x256xf32>
    %49 = vector.shape_cast %48 : vector<1x8x256xf32> to vector<8x256xf32>
    %c56_67 = arith.constant 56 : index
    %c256_68 = arith.constant 256 : index
    %50 = vector.load %arg5[%c56_67, %c256_68] : memref<72x512xf32, #tpu.memory_space<vmem>>, vector<8x256xf32>
    tpu.vector_store %arg5[%c56_67, %c256_68], %49 {strides = array<i32>} : memref<72x512xf32, #tpu.memory_space<vmem>>, vector<8x256xf32>,
    %c1_69 = arith.constant 1 : index
    %c0_70 = arith.constant 0 : index
    %c34_71 = arith.constant 34 : index
    %51 = vector.load %arg1[%c1_69, %c0_70, %c34_71] : memref<2x8x384xf32, #tpu.memory_space<vmem>>, vector<1x8x256xf32>
    %52 = vector.shape_cast %51 : vector<1x8x256xf32> to vector<8x256xf32>
    %c64_72 = arith.constant 64 : index
    %c256_73 = arith.constant 256 : index
    %53 = vector.load %arg5[%c64_72, %c256_73] : memref<72x512xf32, #tpu.memory_space<vmem>>, vector<8x256xf32>
    tpu.vector_store %arg5[%c64_72, %c256_73], %52 {strides = array<i32>} : memref<72x512xf32, #tpu.memory_space<vmem>>, vector<8x256xf32>,
    %c0_74 = arith.constant 0 : index
    %c0_75 = arith.constant 0 : index
    %54 = vector.load %arg2[%c0_74, %c0_75] : memref<8x72xf32, #tpu.memory_space<vmem>>, vector<8x72xf32>
    %c0_76 = arith.constant 0 : index
    %c0_77 = arith.constant 0 : index
    %55 = vector.load %arg5[%c0_76, %c0_77] : memref<72x512xf32, #tpu.memory_space<vmem>>, vector<72x512xf32>
    %cst = arith.constant dense<0.000000e+00> : vector<8x512xf32>
    %56 = tpu.matmul %54, %55, %cst {dimension_numbers = #tpu.dot_dimension_numbers<[1], [0], [0], [1], [0, 0, 1, 1], [], []>} : vector<8x72xf32>, vector<72x512xf32>, vector<8x512xf32> -> vector<8x512xf32>
    %c0_78 = arith.constant 0 : index
    %c0_79 = arith.constant 0 : index
    %57 = vector.load %arg3[%c0_78, %c0_79] : memref<8x1xf32, #tpu.memory_space<vmem>>, vector<8x1xf32>
    %58 = vector.broadcast %57 : vector<8x1xf32> to vector<8x512xf32>
    %59 = arith.addf %56, %58 : vector<8x512xf32>
    %60 = vector.extract_strided_slice %59 {offsets = [0, 0], sizes = [8, 256], strides = [1, 1]} : vector<8x512xf32> to vector<8x256xf32>
    %c0_80 = arith.constant 0 : index
    %c0_81 = arith.constant 0 : index
    %c0_82 = arith.constant 0 : index
    %61 = vector.load %arg4[%c0_80, %c0_81, %c0_82] : memref<2x8x256xf32, #tpu.memory_space<vmem>>, vector<1x8x256xf32>
    %62 = vector.shape_cast %61 : vector<1x8x256xf32> to vector<8x256xf32>
    %63 = vector.shape_cast %60 : vector<8x256xf32> to vector<1x8x256xf32>
    tpu.vector_store %arg4[%c0_80, %c0_81, %c0_82], %63 {strides = array<i32>} : memref<2x8x256xf32, #tpu.memory_space<vmem>>, vector<1x8x256xf32>,
    %64 = vector.extract_strided_slice %59 {offsets = [0, 256], sizes = [8, 256], strides = [1, 1]} : vector<8x512xf32> to vector<8x256xf32>
    %c1_83 = arith.constant 1 : index
    %c0_84 = arith.constant 0 : index
    %c0_85 = arith.constant 0 : index
    %65 = vector.load %arg4[%c1_83, %c0_84, %c0_85] : memref<2x8x256xf32, #tpu.memory_space<vmem>>, vector<1x8x256xf32>
    %66 = vector.shape_cast %65 : vector<1x8x256xf32> to vector<8x256xf32>
    %67 = vector.shape_cast %64 : vector<8x256xf32> to vector<1x8x256xf32>
    tpu.vector_store %arg4[%c1_83, %c0_84, %c0_85], %67 {strides = array<i32>} : memref<2x8x256xf32, #tpu.memory_space<vmem>>, vector<1x8x256xf32>,
    return
  }
  func.func @transform_0(%arg0: i32) -> (i32, i32, i32) {
    %c0_i32 = arith.constant 0 : i32
    %c0_i32_0 = arith.constant 0 : i32
    %c0_i32_1 = arith.constant 0 : i32
    return %arg0, %c0_i32, %c0_i32_0 : i32, i32, i32
  }
  func.func @transform_1(%arg0: i32) -> (i32, i32) {
    %c0_i32 = arith.constant 0 : i32
    %c0_i32_0 = arith.constant 0 : i32
    %c0_i32_1 = arith.constant 0 : i32
    return %c0_i32, %c0_i32_0 : i32, i32
  }
  func.func @transform_2(%arg0: i32) -> (i32, i32) {
    %c0_i32 = arith.constant 0 : i32
    %c0_i32_0 = arith.constant 0 : i32
    %c0_i32_1 = arith.constant 0 : i32
    return %c0_i32, %c0_i32_0 : i32, i32
  }
  func.func @transform_3(%arg0: i32) -> (i32, i32, i32) {
    %c0_i32 = arith.constant 0 : i32
    %c0_i32_0 = arith.constant 0 : i32
    %c0_i32_1 = arith.constant 0 : i32
    return %arg0, %c0_i32, %c0_i32_0 : i32, i32, i32
  }
}

</mosaic_0001>

<llo_original>
// kernel: tpu_custom_call.1
$region0: #{tpu_custom_call.1}
  #allocation0 [shape = 'u32[]', space=smem, size = 0x4, offset = 0x4, fixed_abs, tag = 'smem constant byte address 0x4 - core index']
  #allocation1 [shape = 'u32[72,128]{1,0:T(1,128)}', space=vmem, size = 0x9000, scoped, tag = 'internal scratch']
  #allocation2 [shape = 'f32[72,512]{1,0:T(8,128)}', space=vmem, size = 0x24000, scoped, tag = 'scratch operand']
  %s0 = inlined_call_operand.hbm [shape: f32[2,8,384], index: 0, kind: input, shape index: {}]
  %s1 = inlined_call_operand.vmem [shape: f32[8,72], index: 1, kind: input, shape index: {}]
  %s2 = inlined_call_operand.vmem [shape: f32[8,1], index: 2, kind: input, shape index: {}]
  %s3 = inlined_call_operand.hbm [shape: f32[2,8,256], index: 3, kind: output, shape index: {}]
  %s4 = sld [smem:[#allocation0]]
  $region26: #{tpu_custom_call.1} parent=0
    _
  %s6 = ssub.s32 1, %s4
  %s7 = scalar_select 0, %s6, %s4
  $region1: #{tpu_custom_call.1} parent=0
    #allocation3 [shape = 'u8[24576]{0}', space=vmem, size = 0x6000, scoped, tag = 'input window, operand 0, single buffered']
    #allocation4 [shape = 's32[1]{0}', space=sflag, size = 0x4, scoped, tag = 'scoped memory for tpu_custom_call.1']
    #allocation5 [shape = 's32[1]{0}', space=sflag, size = 0x4, scoped, tag = 'scoped memory for tpu_custom_call.1']
    #allocation6 [shape = 'u8[16384]{0}', space=vmem, size = 0x4000, scoped, tag = 'output window, operand 0, single buffered']
    %8 = vsyncpa [#allocation4], 0
    %9 = vsyncpa [#allocation5], 0
    // Predicated region
    $region2: #{tpu_custom_call.1} parent=1 // pred_check
      _
    $region3: #{tpu_custom_call.1} parent=1 // pred_check_branch
      %11 = sbr.rel (0) target = $region5
    $region4: #{tpu_custom_call.1} parent=1 // pred_region
      %13 = vsyncadd [#allocation4], 0
      %s14 = sshll.u32 %s0, 4
      %s15 = int_to_ptr.hbm [resolvable:$true] %s14
      %s16 = sshll.u32 [#allocation3], 4
      %s17 = int_to_ptr.vmem [resolvable:$true] %s16
      %22 = dma.hbm_to_vmem [thread:$0]  %s15, 768, %s17, [#allocation4], 384, 384, 24
    $region5: #{tpu_custom_call.1} parent=1 // pred_fallthru
      _
    // Predicated region
    $region6: #{tpu_custom_call.1} parent=1 // pred_check
      _
    $region7: #{tpu_custom_call.1} parent=1 // pred_check_branch
      %24 = sbr.rel (0) target = $region9
    $region8: #{tpu_custom_call.1} parent=1 // pred_region
      _
    $region9: #{tpu_custom_call.1} parent=1 // pred_fallthru
      _
    // Predicated region
    $region10: #{tpu_custom_call.1} parent=1 // pred_check
      _
    $region11: #{tpu_custom_call.1} parent=1 // pred_check_branch
      %26 = sbr.rel (0) target = $region13
    $region12: #{tpu_custom_call.1} parent=1 // pred_region
      _
    $region13: #{tpu_custom_call.1} parent=1 // pred_fallthru
      _
    // Predicated region
    $region14: #{tpu_custom_call.1} parent=1 // pred_check
      _
    $region15: #{tpu_custom_call.1} parent=1 // pred_check_branch
      %28 = sbr.rel (0) target = $region17
    $region16: #{tpu_custom_call.1} parent=1 // pred_region
      %30 = dma.done [#allocation4], 768
    $region17: #{tpu_custom_call.1} parent=1 // pred_fallthru
      _
    %v31 = vld [vmem:[#allocation3] sm:$0xff]
    %v32 = vld [vmem:[#allocation3 + $0x8] sm:$0xff]
    %33 = vst [vmem:[#allocation2] sm:$0xff] %v31
    %34 = vst [vmem:[#allocation2 + $0x8] sm:$0xff] %v32
    %v35 = vld [vmem:[#allocation3] sm:$0xff]
    %v36 = vld [vmem:[#allocation3 + $0x8] sm:$0xff]
    %v37 = vld [vmem:[#allocation3 + $0x10] sm:$0xff]
    %41 = vrot.lane.b32.xlu0 %v35, 127
    %v42 = vpop.permute.xlu0 %41
    %43 = vrot.lane.b32.xlu0 %v36, 127
    %v44 = vpop.permute.xlu0 %43
    %45 = vrot.lane.b32.xlu0 %v37, 127
    %v46 = vpop.permute.xlu0 %45
    %vm47 = vcmask 1039360
    %v48 = vsel %vm47, %v42, %v44
    %v49 = vsel %vm47, %v44, %v46
    %52 = vst [vmem:[#allocation2 + $0x20] sm:$0xff] %v48
    %53 = vst [vmem:[#allocation2 + $0x28] sm:$0xff] %v49
    %v54 = vld [vmem:[#allocation3] sm:$0xff]
    %v55 = vld [vmem:[#allocation3 + $0x8] sm:$0xff]
    %v56 = vld [vmem:[#allocation3 + $0x10] sm:$0xff]
    %60 = vrot.lane.b32.xlu0 %v54, 126
    %v61 = vpop.permute.xlu0 %60
    %62 = vrot.lane.b32.xlu0 %v55, 126
    %v63 = vpop.permute.xlu0 %62
    %64 = vrot.lane.b32.xlu0 %v56, 126
    %v65 = vpop.permute.xlu0 %64
    %vm66 = vcmask 1031168
    %v67 = vsel %vm66, %v61, %v63
    %v68 = vsel %vm66, %v63, %v65
    %71 = vst [vmem:[#allocation2 + $0x40] sm:$0xff] %v67
    %72 = vst [vmem:[#allocation2 + $0x48] sm:$0xff] %v68
    %v73 = vld [vmem:[#allocation3] sm:$0xff]
    %v74 = vld [vmem:[#allocation3 + $0x8] sm:$0xff]
    %v75 = vld [vmem:[#allocation3 + $0x10] sm:$0xff]
    %79 = vrot.lane.b32.xlu0 %v73, 112
    %v80 = vpop.permute.xlu0 %79
    %81 = vrot.lane.b32.xlu0 %v74, 112
    %v82 = vpop.permute.xlu0 %81
    %83 = vrot.lane.b32.xlu0 %v75, 112
    %v84 = vpop.permute.xlu0 %83
    %vm85 = vcmask 916480
    %v86 = vsel %vm85, %v80, %v82
    %v87 = vsel %vm85, %v82, %v84
    %90 = vst [vmem:[#allocation2 + $0x60] sm:$0xff] %v86
    %91 = vst [vmem:[#allocation2 + $0x68] sm:$0xff] %v87
    %v92 = vld [vmem:[#allocation3] sm:$0xff]
    %v93 = vld [vmem:[#allocation3 + $0x8] sm:$0xff]
    %v94 = vld [vmem:[#allocation3 + $0x10] sm:$0xff]
    %98 = vrot.lane.b32.xlu0 %v92, 111
    %v99 = vpop.permute.xlu0 %98
    %100 = vrot.lane.b32.xlu0 %v93, 111
    %v101 = vpop.permute.xlu0 %100
    %102 = vrot.lane.b32.xlu0 %v94, 111
    %v103 = vpop.permute.xlu0 %102
    %vm104 = vcmask 908288
    %v105 = vsel %vm104, %v99, %v101
    %v106 = vsel %vm104, %v101, %v103
    %109 = vst [vmem:[#allocation2 + $0x80] sm:$0xff] %v105
    %110 = vst [vmem:[#allocation2 + $0x88] sm:$0xff] %v106
    %v111 = vld [vmem:[#allocation3] sm:$0xff]
    %v112 = vld [vmem:[#allocation3 + $0x8] sm:$0xff]
    %v113 = vld [vmem:[#allocation3 + $0x10] sm:$0xff]
    %117 = vrot.lane.b32.xlu0 %v111, 110
    %v118 = vpop.permute.xlu0 %117
    %119 = vrot.lane.b32.xlu0 %v112, 110
    %v120 = vpop.permute.xlu0 %119
    %121 = vrot.lane.b32.xlu0 %v113, 110
    %v122 = vpop.permute.xlu0 %121
    %vm123 = vcmask 900096
    %v124 = vsel %vm123, %v118, %v120
    %v125 = vsel %vm123, %v120, %v122
    %128 = vst [vmem:[#allocation2 + $0xa0] sm:$0xff] %v124
    %129 = vst [vmem:[#allocation2 + $0xa8] sm:$0xff] %v125
    %v130 = vld [vmem:[#allocation3] sm:$0xff]
    %v131 = vld [vmem:[#allocation3 + $0x8] sm:$0xff]
    %v132 = vld [vmem:[#allocation3 + $0x10] sm:$0xff]
    %136 = vrot.lane.b32.xlu0 %v130, 96
    %v137 = vpop.permute.xlu0 %136
    %138 = vrot.lane.b32.xlu0 %v131, 96
    %v139 = vpop.permute.xlu0 %138
    %140 = vrot.lane.b32.xlu0 %v132, 96
    %v141 = vpop.permute.xlu0 %140
    %vm142 = vcmask 785408
    %v143 = vsel %vm142, %v137, %v139
    %v144 = vsel %vm142, %v139, %v141
    %147 = vst [vmem:[#allocation2 + $0xc0] sm:$0xff] %v143
    %148 = vst [vmem:[#allocation2 + $0xc8] sm:$0xff] %v144
    %v149 = vld [vmem:[#allocation3] sm:$0xff]
    %v150 = vld [vmem:[#allocation3 + $0x8] sm:$0xff]
    %v151 = vld [vmem:[#allocation3 + $0x10] sm:$0xff]
    %155 = vrot.lane.b32.xlu0 %v149, 95
    %v156 = vpop.permute.xlu0 %155
    %157 = vrot.lane.b32.xlu0 %v150, 95
    %v158 = vpop.permute.xlu0 %157
    %159 = vrot.lane.b32.xlu0 %v151, 95
    %v160 = vpop.permute.xlu0 %159
    %vm161 = vcmask 777216
    %v162 = vsel %vm161, %v156, %v158
    %v163 = vsel %vm161, %v158, %v160
    %166 = vst [vmem:[#allocation2 + $0xe0] sm:$0xff] %v162
    %167 = vst [vmem:[#allocation2 + $0xe8] sm:$0xff] %v163
    %v168 = vld [vmem:[#allocation3] sm:$0xff]
    %v169 = vld [vmem:[#allocation3 + $0x8] sm:$0xff]
    %v170 = vld [vmem:[#allocation3 + $0x10] sm:$0xff]
    %174 = vrot.lane.b32.xlu0 %v168, 94
    %v175 = vpop.permute.xlu0 %174
    %176 = vrot.lane.b32.xlu0 %v169, 94
    %v177 = vpop.permute.xlu0 %176
    %178 = vrot.lane.b32.xlu0 %v170, 94
    %v179 = vpop.permute.xlu0 %178
    %vm180 = vcmask 769024
    %v181 = vsel %vm180, %v175, %v177
    %v182 = vsel %vm180, %v177, %v179
    %185 = vst [vmem:[#allocation2 + $0x100] sm:$0xff] %v181
    %186 = vst [vmem:[#allocation2 + $0x108] sm:$0xff] %v182
    %s187 = scalar_lea.vmem [#allocation3], 24
    %v188 = vld [vmem:[%s187] sm:$0xff]
    %v189 = vld [vmem:[%s187 + $0x8] sm:$0xff]
    %190 = vst [vmem:[#allocation2 + $0x10] sm:$0xff] %v188
    %191 = vst [vmem:[#allocation2 + $0x18] sm:$0xff] %v189
    %v192 = vld [vmem:[%s187] sm:$0xff]
    %v193 = vld [vmem:[%s187 + $0x8] sm:$0xff]
    %v194 = vld [vmem:[%s187 + $0x10] sm:$0xff]
    %198 = vrot.lane.b32.xlu0 %v192, 127
    %v199 = vpop.permute.xlu0 %198
    %200 = vrot.lane.b32.xlu0 %v193, 127
    %v201 = vpop.permute.xlu0 %200
    %202 = vrot.lane.b32.xlu0 %v194, 127
    %v203 = vpop.permute.xlu0 %202
    %v204 = vsel %vm47, %v199, %v201
    %v205 = vsel %vm47, %v201, %v203
    %208 = vst [vmem:[#allocation2 + $0x30] sm:$0xff] %v204
    %209 = vst [vmem:[#allocation2 + $0x38] sm:$0xff] %v205
    %v210 = vld [vmem:[%s187] sm:$0xff]
    %v211 = vld [vmem:[%s187 + $0x8] sm:$0xff]
    %v212 = vld [vmem:[%s187 + $0x10] sm:$0xff]
    %216 = vrot.lane.b32.xlu0 %v210, 126
    %v217 = vpop.permute.xlu0 %216
    %218 = vrot.lane.b32.xlu0 %v211, 126
    %v219 = vpop.permute.xlu0 %218
    %220 = vrot.lane.b32.xlu0 %v212, 126
    %v221 = vpop.permute.xlu0 %220
    %v222 = vsel %vm66, %v217, %v219
    %v223 = vsel %vm66, %v219, %v221
    %226 = vst [vmem:[#allocation2 + $0x50] sm:$0xff] %v222
    %227 = vst [vmem:[#allocation2 + $0x58] sm:$0xff] %v223
    %v228 = vld [vmem:[%s187] sm:$0xff]
    %v229 = vld [vmem:[%s187 + $0x8] sm:$0xff]
    %v230 = vld [vmem:[%s187 + $0x10] sm:$0xff]
    %234 = vrot.lane.b32.xlu0 %v228, 112
    %v235 = vpop.permute.xlu0 %234
    %236 = vrot.lane.b32.xlu0 %v229, 112
    %v237 = vpop.permute.xlu0 %236
    %238 = vrot.lane.b32.xlu0 %v230, 112
    %v239 = vpop.permute.xlu0 %238
    %v240 = vsel %vm85, %v235, %v237
    %v241 = vsel %vm85, %v237, %v239
    %244 = vst [vmem:[#allocation2 + $0x70] sm:$0xff] %v240
    %245 = vst [vmem:[#allocation2 + $0x78] sm:$0xff] %v241
    %v246 = vld [vmem:[%s187] sm:$0xff]
    %v247 = vld [vmem:[%s187 + $0x8] sm:$0xff]
    %v248 = vld [vmem:[%s187 + $0x10] sm:$0xff]
    %252 = vrot.lane.b32.xlu0 %v246, 111
    %v253 = vpop.permute.xlu0 %252
    %254 = vrot.lane.b32.xlu0 %v247, 111
    %v255 = vpop.permute.xlu0 %254
    %256 = vrot.lane.b32.xlu0 %v248, 111
    %v257 = vpop.permute.xlu0 %256
    %v258 = vsel %vm104, %v253, %v255
    %v259 = vsel %vm104, %v255, %v257
    %262 = vst [vmem:[#allocation2 + $0x90] sm:$0xff] %v258
    %263 = vst [vmem:[#allocation2 + $0x98] sm:$0xff] %v259
    %v264 = vld [vmem:[%s187] sm:$0xff]
    %v265 = vld [vmem:[%s187 + $0x8] sm:$0xff]
    %v266 = vld [vmem:[%s187 + $0x10] sm:$0xff]
    %270 = vrot.lane.b32.xlu0 %v264, 110
    %v271 = vpop.permute.xlu0 %270
    %272 = vrot.lane.b32.xlu0 %v265, 110
    %v273 = vpop.permute.xlu0 %272
    %274 = vrot.lane.b32.xlu0 %v266, 110
    %v275 = vpop.permute.xlu0 %274
    %v276 = vsel %vm123, %v271, %v273
    %v277 = vsel %vm123, %v273, %v275
    %280 = vst [vmem:[#allocation2 + $0xb0] sm:$0xff] %v276
    %281 = vst [vmem:[#allocation2 + $0xb8] sm:$0xff] %v277
    %v282 = vld [vmem:[%s187] sm:$0xff]
    %v283 = vld [vmem:[%s187 + $0x8] sm:$0xff]
    %v284 = vld [vmem:[%s187 + $0x10] sm:$0xff]
    %288 = vrot.lane.b32.xlu0 %v282, 96
    %v289 = vpop.permute.xlu0 %288
    %290 = vrot.lane.b32.xlu0 %v283, 96
    %v291 = vpop.permute.xlu0 %290
    %292 = vrot.lane.b32.xlu0 %v284, 96
    %v293 = vpop.permute.xlu0 %292
    %v294 = vsel %vm142, %v289, %v291
    %v295 = vsel %vm142, %v291, %v293
    %298 = vst [vmem:[#allocation2 + $0xd0] sm:$0xff] %v294
    %299 = vst [vmem:[#allocation2 + $0xd8] sm:$0xff] %v295
    %v300 = vld [vmem:[%s187] sm:$0xff]
    %v301 = vld [vmem:[%s187 + $0x8] sm:$0xff]
    %v302 = vld [vmem:[%s187 + $0x10] sm:$0xff]
    %306 = vrot.lane.b32.xlu0 %v300, 95
    %v307 = vpop.permute.xlu0 %306
    %308 = vrot.lane.b32.xlu0 %v301, 95
    %v309 = vpop.permute.xlu0 %308
    %310 = vrot.lane.b32.xlu0 %v302, 95
    %v311 = vpop.permute.xlu0 %310
    %v312 = vsel %vm161, %v307, %v309
    %v313 = vsel %vm161, %v309, %v311
    %316 = vst [vmem:[#allocation2 + $0xf0] sm:$0xff] %v312
    %317 = vst [vmem:[#allocation2 + $0xf8] sm:$0xff] %v313
    %v318 = vld [vmem:[%s187] sm:$0xff]
    %v319 = vld [vmem:[%s187 + $0x8] sm:$0xff]
    %v320 = vld [vmem:[%s187 + $0x10] sm:$0xff]
    %324 = vrot.lane.b32.xlu0 %v318, 94
    %v325 = vpop.permute.xlu0 %324
    %326 = vrot.lane.b32.xlu0 %v319, 94
    %v327 = vpop.permute.xlu0 %326
    %328 = vrot.lane.b32.xlu0 %v320, 94
    %v329 = vpop.permute.xlu0 %328
    %v330 = vsel %vm180, %v325, %v327
    %v331 = vsel %vm180, %v327, %v329
    %334 = vst [vmem:[#allocation2 + $0x110] sm:$0xff] %v330
    %335 = vst [vmem:[#allocation2 + $0x118] sm:$0xff] %v331
    %v336 = vld [vmem:[%s1] sm:$0xff]
    %v337 = vld [vmem:[#allocation2] sm:$0xff]
    %v338 = vld [vmem:[#allocation2 + $0x8] sm:$0xff]
    %v339 = vld [vmem:[#allocation2 + $0x10] sm:$0xff]
    %v340 = vld [vmem:[#allocation2 + $0x18] sm:$0xff]
    %v341 = vld [vmem:[#allocation2 + $0x20] sm:$0xff]
    %v342 = vld [vmem:[#allocation2 + $0x28] sm:$0xff]
    %v343 = vld [vmem:[#allocation2 + $0x30] sm:$0xff]
    %v344 = vld [vmem:[#allocation2 + $0x38] sm:$0xff]
    %v345 = vld [vmem:[#allocation2 + $0x40] sm:$0xff]
    %v346 = vld [vmem:[#allocation2 + $0x48] sm:$0xff]
    %v347 = vld [vmem:[#allocation2 + $0x50] sm:$0xff]
    %v348 = vld [vmem:[#allocation2 + $0x58] sm:$0xff]
    %v349 = vld [vmem:[#allocation2 + $0x60] sm:$0xff]
    %v350 = vld [vmem:[#allocation2 + $0x68] sm:$0xff]
    %v351 = vld [vmem:[#allocation2 + $0x70] sm:$0xff]
    %v352 = vld [vmem:[#allocation2 + $0x78] sm:$0xff]
    %v353 = vld [vmem:[#allocation2 + $0x80] sm:$0xff]
    %v354 = vld [vmem:[#allocation2 + $0x88] sm:$0xff]
    %v355 = vld [vmem:[#allocation2 + $0x90] sm:$0xff]
    %v356 = vld [vmem:[#allocation2 + $0x98] sm:$0xff]
    %v357 = vld [vmem:[#allocation2 + $0xa0] sm:$0xff]
    %v358 = vld [vmem:[#allocation2 + $0xa8] sm:$0xff]
    %v359 = vld [vmem:[#allocation2 + $0xb0] sm:$0xff]
    %v360 = vld [vmem:[#allocation2 + $0xb8] sm:$0xff]
    %v361 = vld [vmem:[#allocation2 + $0xc0] sm:$0xff]
    %v362 = vld [vmem:[#allocation2 + $0xc8] sm:$0xff]
    %v363 = vld [vmem:[#allocation2 + $0xd0] sm:$0xff]
    %v364 = vld [vmem:[#allocation2 + $0xd8] sm:$0xff]
    %v365 = vld [vmem:[#allocation2 + $0xe0] sm:$0xff]
    %v366 = vld [vmem:[#allocation2 + $0xe8] sm:$0xff]
    %v367 = vld [vmem:[#allocation2 + $0xf0] sm:$0xff]
    %v368 = vld [vmem:[#allocation2 + $0xf8] sm:$0xff]
    %v369 = vld [vmem:[#allocation2 + $0x100] sm:$0xff]
    %v370 = vld [vmem:[#allocation2 + $0x108] sm:$0xff]
    %v371 = vld [vmem:[#allocation2 + $0x110] sm:$0xff]
    %v372 = vld [vmem:[#allocation2 + $0x118] sm:$0xff]
    %v373 = vld [vmem:[%s2] sm:$0xff]
    %375 = vset.pattern.permute.xlu0 0
    %376 = vperm.xlu0 %375, %v373
    %v377 = vpop.permute.xlu0 %376
    %vm379 = vcmask 588800
    %v381 = vsel %vm379, %v336, 0
    %383 = vmatpush.msra.mxu0 0.0
    %384 = vmatpush.msra.mxu0 0.0
    %385 = vmatpush.msra.mxu0 0.0
    %386 = vmatpush.msra.mxu0 0.0
    %387 = vmatpush.msra.mxu0 0.0
    %388 = vmatpush.msra.mxu0 0.0
    %389 = vmatpush.msra.mxu0 0.0
    %390 = vmatpush.msra.mxu0 %v369
    %391 = vmatpush.msra.mxu0 %v365
    %392 = vmatpush.msra.mxu0 %v361
    %393 = vmatpush.msra.mxu0 %v357
    %394 = vmatpush.msra.mxu0 %v353
    %395 = vmatpush.msra.mxu0 %v349
    %396 = vmatpush.msra.mxu0 %v345
    %397 = vmatpush.msra.mxu0 %v341
    %398 = vmatpush.msra.mxu0 %v337
    %399 = vmatmul.f32.gmra.mxu0 %v381
    %v400 = vpop.f32.mrf.mxu0
    %v401 = vadd.f32 %v377, %v400
    %402 = vdwg.mxu0
    %403 = vmatpush.msra.mxu0 0.0
    %404 = vmatpush.msra.mxu0 0.0
    %405 = vmatpush.msra.mxu0 0.0
    %406 = vmatpush.msra.mxu0 0.0
    %407 = vmatpush.msra.mxu0 0.0
    %408 = vmatpush.msra.mxu0 0.0
    %409 = vmatpush.msra.mxu0 0.0
    %410 = vmatpush.msra.mxu0 %v370
    %411 = vmatpush.msra.mxu0 %v366
    %412 = vmatpush.msra.mxu0 %v362
    %413 = vmatpush.msra.mxu0 %v358
    %414 = vmatpush.msra.mxu0 %v354
    %415 = vmatpush.msra.mxu0 %v350
    %416 = vmatpush.msra.mxu0 %v346
    %417 = vmatpush.msra.mxu0 %v342
    %418 = vmatpush.msra.mxu0 %v338
    %419 = vmatmul.f32.gmra.mxu0 %v381
    %v420 = vpop.f32.mrf.mxu0
    %v421 = vadd.f32 %v377, %v420
    %422 = vdwg.mxu0
    %423 = vmatpush.msra.mxu0 0.0
    %424 = vmatpush.msra.mxu0 0.0
    %425 = vmatpush.msra.mxu0 0.0
    %426 = vmatpush.msra.mxu0 0.0
    %427 = vmatpush.msra.mxu0 0.0
    %428 = vmatpush.msra.mxu0 0.0
    %429 = vmatpush.msra.mxu0 0.0
    %430 = vmatpush.msra.mxu0 %v371
    %431 = vmatpush.msra.mxu0 %v367
    %432 = vmatpush.msra.mxu0 %v363
    %433 = vmatpush.msra.mxu0 %v359
    %434 = vmatpush.msra.mxu0 %v355
    %435 = vmatpush.msra.mxu0 %v351
    %436 = vmatpush.msra.mxu0 %v347
    %437 = vmatpush.msra.mxu0 %v343
    %438 = vmatpush.msra.mxu0 %v339
    %439 = vmatmul.f32.gmra.mxu0 %v381
    %v440 = vpop.f32.mrf.mxu0
    %v441 = vadd.f32 %v377, %v440
    %442 = vdwg.mxu0
    %443 = vmatpush.msra.mxu0 0.0
    %444 = vmatpush.msra.mxu0 0.0
    %445 = vmatpush.msra.mxu0 0.0
    %446 = vmatpush.msra.mxu0 0.0
    %447 = vmatpush.msra.mxu0 0.0
    %448 = vmatpush.msra.mxu0 0.0
    %449 = vmatpush.msra.mxu0 0.0
    %450 = vmatpush.msra.mxu0 %v372
    %451 = vmatpush.msra.mxu0 %v368
    %452 = vmatpush.msra.mxu0 %v364
    %453 = vmatpush.msra.mxu0 %v360
    %454 = vmatpush.msra.mxu0 %v356
    %455 = vmatpush.msra.mxu0 %v352
    %456 = vmatpush.msra.mxu0 %v348
    %457 = vmatpush.msra.mxu0 %v344
    %458 = vmatpush.msra.mxu0 %v340
    %459 = vmatmul.f32.gmra.mxu0 %v381
    %v460 = vpop.f32.mrf.mxu0
    %v461 = vadd.f32 %v377, %v460
    %462 = vdwg.mxu0
    %463 = vst [vmem:[#allocation6] sm:$0xff] %v401
    %464 = vst [vmem:[#allocation6 + $0x8] sm:$0xff] %v421
    %s465 = scalar_lea.vmem [#allocation6], 16
    %466 = vst [vmem:[%s465] sm:$0xff] %v441
    %467 = vst [vmem:[%s465 + $0x8] sm:$0xff] %v461
    // Predicated region
    $region18: #{tpu_custom_call.1} parent=1 // pred_check
      _
    $region19: #{tpu_custom_call.1} parent=1 // pred_check_branch
      %469 = sbr.rel (0) target = $region21
    $region20: #{tpu_custom_call.1} parent=1 // pred_region
      %471 = vsyncadd [#allocation5], 0
      %s472 = sshll.u32 [#allocation6], 4
      %s473 = int_to_ptr.vmem [resolvable:$true] %s472
      %s474 = sshll.u32 %s3, 4
      %s475 = int_to_ptr.hbm [resolvable:$true] %s474
      %480 = dma.vmem_to_hbm [thread:$0]  %s473, 512, %s475, [#allocation5], 256, 256, 16
    $region21: #{tpu_custom_call.1} parent=1 // pred_fallthru
      _
    // Predicated region
    $region22: #{tpu_custom_call.1} parent=1 // pred_check
      _
    $region23: #{tpu_custom_call.1} parent=1 // pred_check_branch
      %482 = sbr.rel (0) target = $region25
    $region24: #{tpu_custom_call.1} parent=1 // pred_region
      %484 = dma.done [#allocation5], 512
    $region25: #{tpu_custom_call.1} parent=1 // pred_fallthru
      _
    %485 = vsyncpa [#allocation4], 1
    %486 = vsyncpa [#allocation5], 1

</llo_original>
